<compile_context>
chip_gen: v6e
topology: v6e:2x2x1
jax: 0.10.0
libtpu: 0.0.40
codegen_flags: <defaults>
</compile_context>

<pallas_src>
import jax
import jax.numpy as jnp
from jax.experimental import pallas as pl
from jax.experimental.pallas import tpu as pltpu

# ---------------------------------------------------------------------------
# Module configuration (mirrors the PyTorch script)
# ---------------------------------------------------------------------------
embedding_dims = {
    'root_stone': 2, 'root_grate': 2, 'root_other': 2, 'trunk_wire': 2,
    'trnk_light': 2, 'trnk_other': 2, 'brch_light': 2, 'brch_shoe': 2,
    'brch_other': 2, 'curb_loc': 2, 'sidewalk': 2, 'spc_common': 16, 'nta': 16,
}
num_embeddings = {
    'root_stone': 2, 'root_grate': 2, 'root_other': 2, 'trunk_wire': 2,
    'trnk_light': 2, 'trnk_other': 2, 'brch_light': 2, 'brch_shoe': 2,
    'brch_other': 2, 'curb_loc': 2, 'sidewalk': 2, 'spc_common': 133, 'nta': 188,
}
COLS = list(num_embeddings.keys())
BINARY_COLS = COLS[:11]          # the 11 two-row / two-dim columns
SPC, NTA = 'spc_common', 'nta'

hidden_size = 32
num_numerical_features = 1
output_size = 3
total_embedding_size = sum(embedding_dims.values())                 # 54
total_input_size = total_embedding_size + num_numerical_features    # 55

NUM_SPC = num_embeddings[SPC]                                        # 133
NUM_NTA = num_embeddings[NTA]                                        # 188
BIG_ROWS = NUM_SPC + NUM_NTA                                         # 321
K_PAD = 384                                                          # 3 x 128-lane chunks
DENSE_K = 16                                                         # 11 binary + num + 1.0 + pad
TB_MAX = 512                                                         # max batch tile (rows / step)


# ---------------------------------------------------------------------------
# Pallas kernel: chunked one-hot folded-embedding matmul + dense-delta matmul
#                + fused MLP + softmax, everything in transposed (feat, batch)
#                orientation so the output is lane-dense.
# ---------------------------------------------------------------------------
def _fused_mlp_kernel(idx2_ref, dense_ref, tbl_ref, small_ref,
                      w2t_ref, b2_ref, w3t_ref, b3_ref, o_ref):
    tb = dense_ref.shape[1]

    spc = idx2_ref[0:1, :]            # (1, TB) int32 in [0, 132]
    nta = idx2_ref[1:2, :]            # (1, TB) int32 already offset to [133, 320]

    iota = jax.lax.broadcasted_iota(jnp.int32, (128, tb), 0)
    # Chunk-restricted, disjoint boolean one-hot; single cast per chunk
    # (0/1 values are exact in bf16).
    mh0 = (iota == spc).astype(jnp.bfloat16)                                # rows   0..127: spc only
    mh1 = ((iota == spc - 128) | (iota == nta - 128)).astype(jnp.bfloat16)  # rows 128..255: spc | nta
    mh2 = (iota == nta - 256).astype(jnp.bfloat16)                          # rows 256..383: nta only

    # fc1: bf16 folded embedding tables (one MXU pass per 128-row chunk) plus
    # the f32 dense part (binary deltas, numerical rank-1 term, fused bias).
    h1 = jnp.dot(tbl_ref[:, 0:128], mh0, preferred_element_type=jnp.float32)
    h1 = h1 + jnp.dot(tbl_ref[:, 128:256], mh1, preferred_element_type=jnp.float32)
    h1 = h1 + jnp.dot(tbl_ref[:, 256:384], mh2, preferred_element_type=jnp.float32)
    h1 = h1 + jnp.dot(small_ref[...], dense_ref[...], preferred_element_type=jnp.float32)
    h1 = jnp.maximum(h1, 0.0)                                               # (32, TB)

    # fc2 + ReLU
    h2 = jnp.dot(w2t_ref[...], h1, preferred_element_type=jnp.float32) + b2_ref[...]
    h2 = jnp.maximum(h2, 0.0)                                               # (32, TB)

    # output + softmax over the 3 classes (sublane axis); explicit 3-way
    # max/sum keeps the reduction trivial and the stores lane-dense.
    logits = jnp.dot(w3t_ref[...], h2, preferred_element_type=jnp.float32) + b3_ref[...]  # (3, TB)
    m = jnp.maximum(jnp.maximum(logits[0:1, :], logits[1:2, :]), logits[2:3, :])
    e = jnp.exp(logits - m)
    denom = e[0:1, :] + e[1:2, :] + e[2:3, :]
    o_ref[...] = e * pl.reciprocal(denom, approx=True)


def _run_fused_mlp(idx2, dense, folded, tb):
    b_pad = idx2.shape[1]
    grid = (b_pad // tb,)

    def streamed(rows):                      # streamed over the batch grid (lanes)
        return pl.BlockSpec((rows, tb), lambda i: (0, i))

    def pinned(shape):                       # constant index map -> VMEM-resident
        return pl.BlockSpec(shape, lambda i: (0, 0))

    return pl.pallas_call(
        _fused_mlp_kernel,
        out_shape=jax.ShapeDtypeStruct((output_size, b_pad), jnp.float32),
        grid_spec=pltpu.PrefetchScalarGridSpec(
            num_scalar_prefetch=0,
            grid=grid,
            in_specs=[
                streamed(2),                        # idx2  (int32: spc row, nta row)
                streamed(DENSE_K),                  # dense (f32: 11 binary, num, 1.0, pad)
                pinned((hidden_size, K_PAD)),       # folded emb@W1 table (bf16, transposed)
                pinned((hidden_size, DENSE_K)),     # deltas / w1_num / fused bias (f32)
                pinned((hidden_size, hidden_size)), # W2^T
                pinned((hidden_size, 1)),           # b2
                pinned((output_size, hidden_size)), # W3^T
                pinned((output_size, 1)),           # b3
            ],
            out_specs=pl.BlockSpec((output_size, tb), lambda i: (0, i)),
        ),
        compiler_params=pltpu.CompilerParams(
            dimension_semantics=("parallel",)),
    )(idx2, dense, folded['tblT'], folded['smallT'],
      folded['w2T'], folded['b2T'], folded['w3T'], folded['b3T'])


# ---------------------------------------------------------------------------
# Parameter initialization (deterministic, torch-like defaults)
# ---------------------------------------------------------------------------
def init_params(key):
    params = {'emb': {}}
    keys = jax.random.split(key, len(COLS) + 6)
    for i, col in enumerate(COLS):                      # torch.nn.Embedding ~ N(0,1)
        params['emb'][col] = jax.random.normal(
            keys[i], (num_embeddings[col], embedding_dims[col]), jnp.float32)

    def linear_init(kw, kb, fan_in, fan_out):
        bound = 1.0 / jnp.sqrt(jnp.float32(fan_in))
        # stored as (in, out) == torch weight (out, in) transposed
        w = jax.random.uniform(kw, (fan_in, fan_out), jnp.float32, -bound, bound)
        b = jax.random.uniform(kb, (1, fan_out), jnp.float32, -bound, bound)
        return w, b

    k = len(COLS)
    params['w1'], params['b1'] = linear_init(keys[k + 0], keys[k + 1],
                                             total_input_size, hidden_size)
    params['w2'], params['b2'] = linear_init(keys[k + 2], keys[k + 3],
                                             hidden_size, hidden_size)
    params['w3'], params['b3'] = linear_init(keys[k + 4], keys[k + 5],
                                             hidden_size, output_size)
    return params


def fold_params(params):
    """Precompute per-column emb@W1 products.

    spc_common / nta stay as a stacked (321 -> pad 384, 32) one-hot table
    (stored transposed in bf16).  Each binary column c contributes
    T_c[0] + idx_c * (T_c[1] - T_c[0]); the constant parts plus b1 fold into
    one bias row and the deltas, together with the numerical W1 row, form a
    tiny (16, 32) dense table consumed by a second matmul in-kernel.
    """
    w1 = params['w1']                                   # (55, 32)
    row = 0
    base = params['b1'][0]                              # (32,): b1 + sum of binary row-0 terms
    deltas = []
    spc_tbl = nta_tbl = None
    for col in COLS:
        d = embedding_dims[col]
        w1c = w1[row:row + d, :]
        t = jnp.dot(params['emb'][col], w1c)            # (num_embeddings[col], 32)
        if col == SPC:
            spc_tbl = t
        elif col == NTA:
            nta_tbl = t
        else:
            base = base + t[0]
            deltas.append(t[1] - t[0])
        row += d
    w1_num = w1[row]                                    # (32,) numerical column of W1

    big = jnp.concatenate([spc_tbl, nta_tbl], axis=0)   # (321, 32)
    big = jnp.pad(big, ((0, K_PAD - BIG_ROWS), (0, 0))) # (384, 32)

    zeros = jnp.zeros((hidden_size,), jnp.float32)
    small = jnp.stack(deltas + [w1_num, base]
                      + [zeros] * (DENSE_K - len(deltas) - 2), axis=0)  # (16, 32)

    return {
        'tblT': big.T.astype(jnp.bfloat16),             # (32, 384) bf16
        'smallT': small.T,                              # (32, 16)  f32
        'w2T': params['w2'].T, 'b2T': params['b2'].T,   # (32, 32), (32, 1)
        'w3T': params['w3'].T, 'b3T': params['b3'].T,   # (3, 32),  (3, 1)
    }


# ---------------------------------------------------------------------------
# Forward pass (only index/dense stacking + batch padding stays as JAX glue)
# ---------------------------------------------------------------------------
def _pick_tb(batch):
    # Large tiles amortize the ~0.35us/grid-step overhead; when the batch is
    # big enough, keep >=2 grid steps so v7x's two TensorCores both get work.
    half = ((max(batch, 1) + 1) // 2 + 127) // 128 * 128
    return max(128, min(TB_MAX, half))


@jax.jit
def tabular_nn_forward(folded, numerical_features, categorical_features):
    b = numerical_features.shape[0]
    tb = _pick_tb(b)
    b_pad = ((b + tb - 1) // tb) * tb
    pad = b_pad - b

    spc = categorical_features[SPC].astype(jnp.int32)
    nta = categorical_features[NTA].astype(jnp.int32) + NUM_SPC
    idx2 = jnp.stack([spc, nta], axis=0)                                     # (2, B)

    ones = jnp.ones((b,), jnp.float32)
    zeros = jnp.zeros((b,), jnp.float32)
    dense_rows = ([categorical_features[c].astype(jnp.float32) for c in BINARY_COLS]
                  + [numerical_features[:, 0].astype(jnp.float32), ones]
                  + [zeros] * (DENSE_K - len(BINARY_COLS) - 2))
    dense = jnp.stack(dense_rows, axis=0)                                    # (16, B)

    idx2 = jnp.pad(idx2, ((0, 0), (0, pad)))
    dense = jnp.pad(dense, ((0, 0), (0, pad)))

    out_t = _run_fused_mlp(idx2, dense, folded, tb)                          # (3, b_pad)
    return out_t[:, :b].T                                                    # (B, 3)


# ---------------------------------------------------------------------------
# Pure-JAX reference (unfolded) for correctness checking
# ---------------------------------------------------------------------------
def reference_forward(params, numerical, categorical):
    embedded = [params['emb'][col][categorical[col].astype(jnp.int32)] for col in COLS]
    combined = jnp.concatenate(embedded + [numerical], axis=1)
    h1 = jnp.maximum(combined @ params['w1'] + params['b1'], 0.0)
    h2 = jnp.maximum(h1 @ params['w2'] + params['b2'], 0.0)
    logits = h2 @ params['w3'] + params['b3']
    return jax.nn.softmax(logits, axis=-1)


# ---------------------------------------------------------------------------
# Main
# ---------------------------------------------------------------------------
if __name__ == "__main__":
    root = jax.random.PRNGKey(0)
    k_params, k_num, k_cat = jax.random.split(root, 3)

    params = init_params(k_params)
    folded = fold_params(params)

    # B=8: single small tile; B=300: tb=256 -> 2 grid steps, exercises pinned
    # weights across steps and the "parallel" batch axis.
    for B in (8, 300):
        kn = jax.random.fold_in(k_num, B)
        kc = jax.random.fold_in(k_cat, B)
        numerical = jax.random.normal(kn, (B, num_numerical_features), jnp.float32)
        cat_keys = jax.random.split(kc, len(COLS))
        categorical = {
            col: jax.random.randint(cat_keys[i], (B,), 0, num_embeddings[col],
                                    dtype=jnp.int32)
            for i, col in enumerate(COLS)
        }

        out = jax.block_until_ready(tabular_nn_forward(folded, numerical, categorical))
        assert out.shape == (B, output_size)
        # softmax rows sum to ~1 (approx reciprocal + bf16 fc1 -> loose tolerance)
        assert jnp.allclose(jnp.sum(out, axis=-1), 1.0, atol=1e-2)
        ref = reference_forward(params, numerical, categorical)
        assert jnp.allclose(out, ref, atol=1e-2), float(jnp.max(jnp.abs(out - ref)))

    print("KERNEL_OK")
</pallas_src>

<mosaic_0001>
module attributes {stable_mosaic.version = 11 : i64} {
  func.func @_fused_mlp_kernel(%arg0: i32, %arg1: memref<2x128xi32, #tpu.memory_space<vmem>>, %arg2: memref<16x128xf32, #tpu.memory_space<vmem>>, %arg3: memref<32x384xbf16, #tpu.memory_space<vmem>>, %arg4: memref<32x16xf32, #tpu.memory_space<vmem>>, %arg5: memref<32x32xf32, #tpu.memory_space<vmem>>, %arg6: memref<32x1xf32, #tpu.memory_space<vmem>>, %arg7: memref<3x32xf32, #tpu.memory_space<vmem>>, %arg8: memref<3x1xf32, #tpu.memory_space<vmem>>, %arg9: memref<3x128xf32, #tpu.memory_space<vmem>>) attributes {dimension_semantics = [#tpu.dimension_semantics<parallel>], iteration_bounds = array<i64: 1>, scalar_prefetch = 0 : i64, scratch_operands = 0 : i64, tpu.core_type = #tpu.core_type<tc>, window_params = [{transform_indices = @transform_0, window_bounds = array<i64: 2, 128>}, {transform_indices = @transform_1, window_bounds = array<i64: 16, 128>}, {pipeline_mode = #tpu.pipeline_mode<synchronous>, transform_indices = @transform_2, window_bounds = array<i64: 32, 384>}, {pipeline_mode = #tpu.pipeline_mode<synchronous>, transform_indices = @transform_3, window_bounds = array<i64: 32, 16>}, {pipeline_mode = #tpu.pipeline_mode<synchronous>, transform_indices = @transform_4, window_bounds = array<i64: 32, 32>}, {pipeline_mode = #tpu.pipeline_mode<synchronous>, transform_indices = @transform_5, window_bounds = array<i64: 32, 1>}, {pipeline_mode = #tpu.pipeline_mode<synchronous>, transform_indices = @transform_6, window_bounds = array<i64: 3, 32>}, {pipeline_mode = #tpu.pipeline_mode<synchronous>, transform_indices = @transform_7, window_bounds = array<i64: 3, 1>}, {transform_indices = @transform_8, window_bounds = array<i64: 3, 128>}]} {
    %c0 = arith.constant 0 : index
    %c0_0 = arith.constant 0 : index
    %0 = vector.load %arg1[%c0, %c0_0] : memref<2x128xi32, #tpu.memory_space<vmem>>, vector<1x128xi32>
    %c1 = arith.constant 1 : index
    %c0_1 = arith.constant 0 : index
    %1 = vector.load %arg1[%c1, %c0_1] : memref<2x128xi32, #tpu.memory_space<vmem>>, vector<1x128xi32>
    %2 = tpu.iota {dimensions = array<i32: 0>} : vector<128x128xi32>
    %3 = vector.broadcast %0 : vector<1x128xi32> to vector<128x128xi32>
    %4 = arith.cmpi eq, %2, %3 : vector<128x128xi32>
    %5 = arith.extui %4 : vector<128x128xi1> to vector<128x128xi32>
    %6 = arith.sitofp %5 : vector<128x128xi32> to vector<128x128xf32>
    %7 = arith.truncf %6 : vector<128x128xf32> to vector<128x128xbf16>
    %c128_i32 = arith.constant 128 : i32
    %8 = vector.broadcast %c128_i32 : i32 to vector<1x128xi32>
    %9 = arith.subi %0, %8 : vector<1x128xi32>
    %10 = vector.broadcast %9 : vector<1x128xi32> to vector<128x128xi32>
    %11 = arith.cmpi eq, %2, %10 : vector<128x128xi32>
    %c128_i32_2 = arith.constant 128 : i32
    %12 = vector.broadcast %c128_i32_2 : i32 to vector<1x128xi32>
    %13 = arith.subi %1, %12 : vector<1x128xi32>
    %14 = vector.broadcast %13 : vector<1x128xi32> to vector<128x128xi32>
    %15 = arith.cmpi eq, %2, %14 : vector<128x128xi32>
    %16 = arith.ori %11, %15 : vector<128x128xi1>
    %17 = arith.extui %16 : vector<128x128xi1> to vector<128x128xi32>
    %18 = arith.sitofp %17 : vector<128x128xi32> to vector<128x128xf32>
    %19 = arith.truncf %18 : vector<128x128xf32> to vector<128x128xbf16>
    %c256_i32 = arith.constant 256 : i32
    %20 = vector.broadcast %c256_i32 : i32 to vector<1x128xi32>
    %21 = arith.subi %1, %20 : vector<1x128xi32>
    %22 = vector.broadcast %21 : vector<1x128xi32> to vector<128x128xi32>
    %23 = arith.cmpi eq, %2, %22 : vector<128x128xi32>
    %24 = arith.extui %23 : vector<128x128xi1> to vector<128x128xi32>
    %25 = arith.sitofp %24 : vector<128x128xi32> to vector<128x128xf32>
    %26 = arith.truncf %25 : vector<128x128xf32> to vector<128x128xbf16>
    %c0_3 = arith.constant 0 : index
    %c0_4 = arith.constant 0 : index
    %27 = vector.load %arg3[%c0_3, %c0_4] : memref<32x384xbf16, #tpu.memory_space<vmem>>, vector<32x128xbf16>
    %cst = arith.constant dense<0.000000e+00> : vector<32x128xf32>
    %28 = tpu.matmul %27, %7, %cst {dimension_numbers = #tpu.dot_dimension_numbers<[1], [0], [0], [1], [0, 0, 1, 1], [], []>} : vector<32x128xbf16>, vector<128x128xbf16>, vector<32x128xf32> -> vector<32x128xf32>
    %c0_5 = arith.constant 0 : index
    %c128 = arith.constant 128 : index
    %29 = vector.load %arg3[%c0_5, %c128] : memref<32x384xbf16, #tpu.memory_space<vmem>>, vector<32x128xbf16>
    %cst_6 = arith.constant dense<0.000000e+00> : vector<32x128xf32>
    %30 = tpu.matmul %29, %19, %cst_6 {dimension_numbers = #tpu.dot_dimension_numbers<[1], [0], [0], [1], [0, 0, 1, 1], [], []>} : vector<32x128xbf16>, vector<128x128xbf16>, vector<32x128xf32> -> vector<32x128xf32>
    %31 = arith.addf %28, %30 : vector<32x128xf32>
    %c0_7 = arith.constant 0 : index
    %c256 = arith.constant 256 : index
    %32 = vector.load %arg3[%c0_7, %c256] : memref<32x384xbf16, #tpu.memory_space<vmem>>, vector<32x128xbf16>
    %cst_8 = arith.constant dense<0.000000e+00> : vector<32x128xf32>
    %33 = tpu.matmul %32, %26, %cst_8 {dimension_numbers = #tpu.dot_dimension_numbers<[1], [0], [0], [1], [0, 0, 1, 1], [], []>} : vector<32x128xbf16>, vector<128x128xbf16>, vector<32x128xf32> -> vector<32x128xf32>
    %34 = arith.addf %31, %33 : vector<32x128xf32>
    %c0_9 = arith.constant 0 : index
    %c0_10 = arith.constant 0 : index
    %35 = vector.load %arg4[%c0_9, %c0_10] : memref<32x16xf32, #tpu.memory_space<vmem>>, vector<32x16xf32>
    %c0_11 = arith.constant 0 : index
    %c0_12 = arith.constant 0 : index
    %36 = vector.load %arg2[%c0_11, %c0_12] : memref<16x128xf32, #tpu.memory_space<vmem>>, vector<16x128xf32>
    %cst_13 = arith.constant dense<0.000000e+00> : vector<32x128xf32>
    %37 = tpu.matmul %35, %36, %cst_13 {dimension_numbers = #tpu.dot_dimension_numbers<[1], [0], [0], [1], [0, 0, 1, 1], [], []>} : vector<32x16xf32>, vector<16x128xf32>, vector<32x128xf32> -> vector<32x128xf32>
    %38 = arith.addf %34, %37 : vector<32x128xf32>
    %cst_14 = arith.constant 0.000000e+00 : f32
    %39 = vector.broadcast %cst_14 : f32 to vector<32x128xf32>
    %40 = arith.maximumf %38, %39 : vector<32x128xf32>
    %c0_15 = arith.constant 0 : index
    %c0_16 = arith.constant 0 : index
    %41 = vector.load %arg5[%c0_15, %c0_16] : memref<32x32xf32, #tpu.memory_space<vmem>>, vector<32x32xf32>
    %cst_17 = arith.constant dense<0.000000e+00> : vector<32x128xf32>
    %42 = tpu.matmul %41, %40, %cst_17 {dimension_numbers = #tpu.dot_dimension_numbers<[1], [0], [0], [1], [0, 0, 1, 1], [], []>} : vector<32x32xf32>, vector<32x128xf32>, vector<32x128xf32> -> vector<32x128xf32>
    %c0_18 = arith.constant 0 : index
    %c0_19 = arith.constant 0 : index
    %43 = vector.load %arg6[%c0_18, %c0_19] : memref<32x1xf32, #tpu.memory_space<vmem>>, vector<32x1xf32>
    %44 = vector.broadcast %43 : vector<32x1xf32> to vector<32x128xf32>
    %45 = arith.addf %42, %44 : vector<32x128xf32>
    %cst_20 = arith.constant 0.000000e+00 : f32
    %46 = vector.broadcast %cst_20 : f32 to vector<32x128xf32>
    %47 = arith.maximumf %45, %46 : vector<32x128xf32>
    %c0_21 = arith.constant 0 : index
    %c0_22 = arith.constant 0 : index
    %48 = vector.load %arg7[%c0_21, %c0_22] : memref<3x32xf32, #tpu.memory_space<vmem>>, vector<3x32xf32>
    %cst_23 = arith.constant dense<0.000000e+00> : vector<3x128xf32>
    %49 = tpu.matmul %48, %47, %cst_23 {dimension_numbers = #tpu.dot_dimension_numbers<[1], [0], [0], [1], [0, 0, 1, 1], [], []>} : vector<3x32xf32>, vector<32x128xf32>, vector<3x128xf32> -> vector<3x128xf32>
    %c0_24 = arith.constant 0 : index
    %c0_25 = arith.constant 0 : index
    %50 = vector.load %arg8[%c0_24, %c0_25] : memref<3x1xf32, #tpu.memory_space<vmem>>, vector<3x1xf32>
    %51 = vector.broadcast %50 : vector<3x1xf32> to vector<3x128xf32>
    %52 = arith.addf %49, %51 : vector<3x128xf32>
    %53 = vector.extract_strided_slice %52 {offsets = [0, 0], sizes = [1, 128], strides = [1, 1]} : vector<3x128xf32> to vector<1x128xf32>
    %54 = vector.extract_strided_slice %52 {offsets = [1, 0], sizes = [1, 128], strides = [1, 1]} : vector<3x128xf32> to vector<1x128xf32>
    %55 = arith.maximumf %53, %54 : vector<1x128xf32>
    %56 = vector.extract_strided_slice %52 {offsets = [2, 0], sizes = [1, 128], strides = [1, 1]} : vector<3x128xf32> to vector<1x128xf32>
    %57 = arith.maximumf %55, %56 : vector<1x128xf32>
    %58 = vector.broadcast %57 : vector<1x128xf32> to vector<3x128xf32>
    %59 = arith.subf %52, %58 : vector<3x128xf32>
    %60 = math.exp %59 : vector<3x128xf32>
    %61 = vector.extract_strided_slice %60 {offsets = [0, 0], sizes = [1, 128], strides = [1, 1]} : vector<3x128xf32> to vector<1x128xf32>
    %62 = vector.extract_strided_slice %60 {offsets = [1, 0], sizes = [1, 128], strides = [1, 1]} : vector<3x128xf32> to vector<1x128xf32>
    %63 = arith.addf %61, %62 : vector<1x128xf32>
    %64 = vector.extract_strided_slice %60 {offsets = [2, 0], sizes = [1, 128], strides = [1, 1]} : vector<3x128xf32> to vector<1x128xf32>
    %65 = arith.addf %63, %64 : vector<1x128xf32>
    %66 = tpu.reciprocal %65 {approx = true} : vector<1x128xf32> -> vector<1x128xf32>
    %67 = vector.broadcast %66 : vector<1x128xf32> to vector<3x128xf32>
    %68 = arith.mulf %60, %67 : vector<3x128xf32>
    %c0_26 = arith.constant 0 : index
    %c0_27 = arith.constant 0 : index
    %69 = vector.load %arg9[%c0_26, %c0_27] : memref<3x128xf32, #tpu.memory_space<vmem>>, vector<3x128xf32>
    tpu.vector_store %arg9[%c0_26, %c0_27], %68 {strides = array<i32>} : memref<3x128xf32, #tpu.memory_space<vmem>>, vector<3x128xf32>,
    return
  }
  func.func @transform_0(%arg0: i32) -> (i32, i32) {
    %c0_i32 = arith.constant 0 : i32
    %c0_i32_0 = arith.constant 0 : i32
    return %c0_i32, %arg0 : i32, i32
  }
  func.func @transform_1(%arg0: i32) -> (i32, i32) {
    %c0_i32 = arith.constant 0 : i32
    %c0_i32_0 = arith.constant 0 : i32
    return %c0_i32, %arg0 : i32, i32
  }
  func.func @transform_2(%arg0: i32) -> (i32, i32) {
    %c0_i32 = arith.constant 0 : i32
    %c0_i32_0 = arith.constant 0 : i32
    %c0_i32_1 = arith.constant 0 : i32
    return %c0_i32, %c0_i32_0 : i32, i32
  }
  func.func @transform_3(%arg0: i32) -> (i32, i32) {
    %c0_i32 = arith.constant 0 : i32
    %c0_i32_0 = arith.constant 0 : i32
    %c0_i32_1 = arith.constant 0 : i32
    return %c0_i32, %c0_i32_0 : i32, i32
  }
  func.func @transform_4(%arg0: i32) -> (i32, i32) {
    %c0_i32 = arith.constant 0 : i32
    %c0_i32_0 = arith.constant 0 : i32
    %c0_i32_1 = arith.constant 0 : i32
    return %c0_i32, %c0_i32_0 : i32, i32
  }
  func.func @transform_5(%arg0: i32) -> (i32, i32) {
    %c0_i32 = arith.constant 0 : i32
    %c0_i32_0 = arith.constant 0 : i32
    %c0_i32_1 = arith.constant 0 : i32
    return %c0_i32, %c0_i32_0 : i32, i32
  }
  func.func @transform_6(%arg0: i32) -> (i32, i32) {
    %c0_i32 = arith.constant 0 : i32
    %c0_i32_0 = arith.constant 0 : i32
    %c0_i32_1 = arith.constant 0 : i32
    return %c0_i32, %c0_i32_0 : i32, i32
  }
  func.func @transform_7(%arg0: i32) -> (i32, i32) {
    %c0_i32 = arith.constant 0 : i32
    %c0_i32_0 = arith.constant 0 : i32
    %c0_i32_1 = arith.constant 0 : i32
    return %c0_i32, %c0_i32_0 : i32, i32
  }
  func.func @transform_8(%arg0: i32) -> (i32, i32) {
    %c0_i32 = arith.constant 0 : i32
    %c0_i32_0 = arith.constant 0 : i32
    return %c0_i32, %arg0 : i32, i32
  }
}

</mosaic_0001>

<llo_original>
// kernel: tabular_nn_forward.1
$region0: #{tabular_nn_forward.1}
  #allocation0 [shape = 'u32[]', space=smem, size = 0x4, offset = 0x4, fixed_abs, tag = 'smem constant byte address 0x4 - core index']
  #allocation1 [shape = 'u32[144,128]{1,0:T(1,128)}', space=vmem, size = 0x12000, scoped, tag = 'internal scratch']
  %s0 = inlined_call_operand.vmem [shape: s32[2,128], index: 0, kind: input, shape index: {}]
  %s1 = inlined_call_operand.vmem [shape: f32[16,128], index: 1, kind: input, shape index: {}]
  %s2 = inlined_call_operand.vmem [shape: bf16[32,384], index: 2, kind: input, shape index: {}]
  %s3 = inlined_call_operand.vmem [shape: f32[32,16], index: 3, kind: input, shape index: {}]
  %s4 = inlined_call_operand.vmem [shape: f32[32,32], index: 4, kind: input, shape index: {}]
  %s5 = inlined_call_operand.vmem [shape: f32[32,1], index: 5, kind: input, shape index: {}]
  %s6 = inlined_call_operand.vmem [shape: f32[3,32], index: 6, kind: input, shape index: {}]
  %s7 = inlined_call_operand.vmem [shape: f32[3,1], index: 7, kind: input, shape index: {}]
  %s8 = inlined_call_operand.vmem [shape: f32[3,128], index: 8, kind: output, shape index: {}]
  %s9 = sld [smem:[#allocation0]]
  $region42: #{tabular_nn_forward.1} parent=0
    _
  %s11 = ssub.s32 1, %s9
  %s12 = scalar_select 0, %s11, %s9
  // Predicated region
  $region2: #{tabular_nn_forward.1} parent=0 // pred_check
    _
  $region3: #{tabular_nn_forward.1} parent=0 // pred_check_branch
    %14 = sbr.rel (0) target = $region5
  $region4: #{tabular_nn_forward.1} parent=0 // pred_region
    _
  $region5: #{tabular_nn_forward.1} parent=0 // pred_fallthru
    _
  // Predicated region
  $region6: #{tabular_nn_forward.1} parent=0 // pred_check
    _
  $region7: #{tabular_nn_forward.1} parent=0 // pred_check_branch
    %16 = sbr.rel (0) target = $region9
  $region8: #{tabular_nn_forward.1} parent=0 // pred_region
    _
  $region9: #{tabular_nn_forward.1} parent=0 // pred_fallthru
    _
  // Predicated region
  $region10: #{tabular_nn_forward.1} parent=0 // pred_check
    _
  $region11: #{tabular_nn_forward.1} parent=0 // pred_check_branch
    %18 = sbr.rel (0) target = $region13
  $region12: #{tabular_nn_forward.1} parent=0 // pred_region
    _
  $region13: #{tabular_nn_forward.1} parent=0 // pred_fallthru
    _
  // Predicated region
  $region14: #{tabular_nn_forward.1} parent=0 // pred_check
    _
  $region15: #{tabular_nn_forward.1} parent=0 // pred_check_branch
    %20 = sbr.rel (0) target = $region17
  $region16: #{tabular_nn_forward.1} parent=0 // pred_region
    _
  $region17: #{tabular_nn_forward.1} parent=0 // pred_fallthru
    _
  // Predicated region
  $region18: #{tabular_nn_forward.1} parent=0 // pred_check
    _
  $region19: #{tabular_nn_forward.1} parent=0 // pred_check_branch
    %22 = sbr.rel (0) target = $region21
  $region20: #{tabular_nn_forward.1} parent=0 // pred_region
    _
  $region21: #{tabular_nn_forward.1} parent=0 // pred_fallthru
    _
  // Predicated region
  $region22: #{tabular_nn_forward.1} parent=0 // pred_check
    _
  $region23: #{tabular_nn_forward.1} parent=0 // pred_check_branch
    %24 = sbr.rel (0) target = $region25
  $region24: #{tabular_nn_forward.1} parent=0 // pred_region
    _
  $region25: #{tabular_nn_forward.1} parent=0 // pred_fallthru
    _
  // Predicated region
  $region26: #{tabular_nn_forward.1} parent=0 // pred_check
    _
  $region27: #{tabular_nn_forward.1} parent=0 // pred_check_branch
    %26 = sbr.rel (0) target = $region29
  $region28: #{tabular_nn_forward.1} parent=0 // pred_region
    _
  $region29: #{tabular_nn_forward.1} parent=0 // pred_fallthru
    _
  // Predicated region
  $region30: #{tabular_nn_forward.1} parent=0 // pred_check
    _
  $region31: #{tabular_nn_forward.1} parent=0 // pred_check_branch
    %28 = sbr.rel (0) target = $region33
  $region32: #{tabular_nn_forward.1} parent=0 // pred_region
    _
  $region33: #{tabular_nn_forward.1} parent=0 // pred_fallthru
    _
  %v30 = vld [vmem:[%s0] sm:$0x1]
  %v31 = vld [vmem:[%s0 + $0x1] sm:$0x1]
  %v32 = vlaneseq
  %v33 = vshrl.u32 %v32, 7
  %v34 = vadd.s32 %v33, 8
  %v35 = vadd.s32 %v33, 16
  %v36 = vadd.s32 %v33, 24
  %v37 = vadd.s32 %v33, 32
  %v38 = vadd.s32 %v33, 40
  %v39 = vadd.s32 %v33, 48
  %v40 = vadd.s32 %v33, 56
  %v41 = vadd.s32 %v33, 64
  %v42 = vadd.s32 %v33, 72
  %v43 = vadd.s32 %v33, 80
  %v44 = vadd.s32 %v33, 88
  %v45 = vadd.s32 %v33, 96
  %v46 = vadd.s32 %v33, 104
  %v47 = vadd.s32 %v33, 112
  %v48 = vadd.s32 %v33, 120
  %v49 = vlaneseq
  %v50 = vshrl.u32 %v49, 7
  %v51 = vsub.s32 0, %v50
  %v52 = vrot.slane %v30, %v51
  %vm53 = vcmp.eq.s32.totalorder %v33, %v52
  %vm54 = vcmp.eq.s32.totalorder %v34, %v52
  %vm55 = vcmp.eq.s32.totalorder %v35, %v52
  %vm56 = vcmp.eq.s32.totalorder %v36, %v52
  %vm57 = vcmp.eq.s32.totalorder %v37, %v52
  %vm58 = vcmp.eq.s32.totalorder %v38, %v52
  %vm59 = vcmp.eq.s32.totalorder %v39, %v52
  %vm60 = vcmp.eq.s32.totalorder %v40, %v52
  %vm61 = vcmp.eq.s32.totalorder %v41, %v52
  %vm62 = vcmp.eq.s32.totalorder %v42, %v52
  %vm63 = vcmp.eq.s32.totalorder %v43, %v52
  %vm64 = vcmp.eq.s32.totalorder %v44, %v52
  %vm65 = vcmp.eq.s32.totalorder %v45, %v52
  %vm66 = vcmp.eq.s32.totalorder %v46, %v52
  %vm67 = vcmp.eq.s32.totalorder %v47, %v52
  %vm68 = vcmp.eq.s32.totalorder %v48, %v52
  %v69 = vsel %vm53, 1, 0
  %v70 = vsel %vm54, 1, 0
  %v71 = vsel %vm55, 1, 0
  %v72 = vsel %vm56, 1, 0
  %v73 = vsel %vm57, 1, 0
  %v74 = vsel %vm58, 1, 0
  %v75 = vsel %vm59, 1, 0
  %v76 = vsel %vm60, 1, 0
  %v77 = vsel %vm61, 1, 0
  %v78 = vsel %vm62, 1, 0
  %v79 = vsel %vm63, 1, 0
  %v80 = vsel %vm64, 1, 0
  %v81 = vsel %vm65, 1, 0
  %v82 = vsel %vm66, 1, 0
  %v83 = vsel %vm67, 1, 0
  %v84 = vsel %vm68, 1, 0
  %v85 = vcvt.s32.f32 %v69
  %v86 = vcvt.s32.f32 %v70
  %v87 = vcvt.s32.f32 %v71
  %v88 = vcvt.s32.f32 %v72
  %v89 = vcvt.s32.f32 %v73
  %v90 = vcvt.s32.f32 %v74
  %v91 = vcvt.s32.f32 %v75
  %v92 = vcvt.s32.f32 %v76
  %v93 = vcvt.s32.f32 %v77
  %v94 = vcvt.s32.f32 %v78
  %v95 = vcvt.s32.f32 %v79
  %v96 = vcvt.s32.f32 %v80
  %v97 = vcvt.s32.f32 %v81
  %v98 = vcvt.s32.f32 %v82
  %v99 = vcvt.s32.f32 %v83
  %v100 = vcvt.s32.f32 %v84
  %v101 = vpack.c.bf16 %v86, %v85
  %v102 = vpack.c.bf16 %v88, %v87
  %v103 = vpack.c.bf16 %v90, %v89
  %v104 = vpack.c.bf16 %v92, %v91
  %v105 = vpack.c.bf16 %v94, %v93
  %v106 = vpack.c.bf16 %v96, %v95
  %v107 = vpack.c.bf16 %v98, %v97
  %v108 = vpack.c.bf16 %v100, %v99
  %v109 = vsub.s32 %v30, 128
  %v110 = vlaneseq
  %v111 = vshrl.u32 %v110, 7
  %v112 = vsub.s32 0, %v111
  %v113 = vrot.slane %v109, %v112
  %vm114 = vcmp.eq.s32.totalorder %v33, %v113
  %vm115 = vcmp.eq.s32.totalorder %v34, %v113
  %vm116 = vcmp.eq.s32.totalorder %v35, %v113
  %vm117 = vcmp.eq.s32.totalorder %v36, %v113
  %vm118 = vcmp.eq.s32.totalorder %v37, %v113
  %vm119 = vcmp.eq.s32.totalorder %v38, %v113
  %vm120 = vcmp.eq.s32.totalorder %v39, %v113
  %vm121 = vcmp.eq.s32.totalorder %v40, %v113
  %vm122 = vcmp.eq.s32.totalorder %v41, %v113
  %vm123 = vcmp.eq.s32.totalorder %v42, %v113
  %vm124 = vcmp.eq.s32.totalorder %v43, %v113
  %vm125 = vcmp.eq.s32.totalorder %v44, %v113
  %vm126 = vcmp.eq.s32.totalorder %v45, %v113
  %vm127 = vcmp.eq.s32.totalorder %v46, %v113
  %vm128 = vcmp.eq.s32.totalorder %v47, %v113
  %vm129 = vcmp.eq.s32.totalorder %v48, %v113
  %v130 = vsub.s32 %v31, 128
  %v131 = vlaneseq
  %v132 = vshrl.u32 %v131, 7
  %v133 = vsub.s32 0, %v132
  %v134 = vrot.slane %v130, %v133
  %vm135 = vcmp.eq.s32.totalorder %v33, %v134
  %vm136 = vcmp.eq.s32.totalorder %v34, %v134
  %vm137 = vcmp.eq.s32.totalorder %v35, %v134
  %vm138 = vcmp.eq.s32.totalorder %v36, %v134
  %vm139 = vcmp.eq.s32.totalorder %v37, %v134
  %vm140 = vcmp.eq.s32.totalorder %v38, %v134
  %vm141 = vcmp.eq.s32.totalorder %v39, %v134
  %vm142 = vcmp.eq.s32.totalorder %v40, %v134
  %vm143 = vcmp.eq.s32.totalorder %v41, %v134
  %vm144 = vcmp.eq.s32.totalorder %v42, %v134
  %vm145 = vcmp.eq.s32.totalorder %v43, %v134
  %vm146 = vcmp.eq.s32.totalorder %v44, %v134
  %vm147 = vcmp.eq.s32.totalorder %v45, %v134
  %vm148 = vcmp.eq.s32.totalorder %v46, %v134
  %vm149 = vcmp.eq.s32.totalorder %v47, %v134
  %vm150 = vcmp.eq.s32.totalorder %v48, %v134
  %vm151 = vmor %vm114, %vm135
  %vm152 = vmor %vm115, %vm136
  %vm153 = vmor %vm116, %vm137
  %vm154 = vmor %vm117, %vm138
  %vm155 = vmor %vm118, %vm139
  %vm156 = vmor %vm119, %vm140
  %vm157 = vmor %vm120, %vm141
  %vm158 = vmor %vm121, %vm142
  %vm159 = vmor %vm122, %vm143
  %vm160 = vmor %vm123, %vm144
  %vm161 = vmor %vm124, %vm145
  %vm162 = vmor %vm125, %vm146
  %vm163 = vmor %vm126, %vm147
  %vm164 = vmor %vm127, %vm148
  %vm165 = vmor %vm128, %vm149
  %vm166 = vmor %vm129, %vm150
  %v167 = vsel %vm151, 1, 0
  %v168 = vsel %vm152, 1, 0
  %v169 = vsel %vm153, 1, 0
  %v170 = vsel %vm154, 1, 0
  %v171 = vsel %vm155, 1, 0
  %v172 = vsel %vm156, 1, 0
  %v173 = vsel %vm157, 1, 0
  %v174 = vsel %vm158, 1, 0
  %v175 = vsel %vm159, 1, 0
  %v176 = vsel %vm160, 1, 0
  %v177 = vsel %vm161, 1, 0
  %v178 = vsel %vm162, 1, 0
  %v179 = vsel %vm163, 1, 0
  %v180 = vsel %vm164, 1, 0
  %v181 = vsel %vm165, 1, 0
  %v182 = vsel %vm166, 1, 0
  %v183 = vcvt.s32.f32 %v167
  %v184 = vcvt.s32.f32 %v168
  %v185 = vcvt.s32.f32 %v169
  %v186 = vcvt.s32.f32 %v170
  %v187 = vcvt.s32.f32 %v171
  %v188 = vcvt.s32.f32 %v172
  %v189 = vcvt.s32.f32 %v173
  %v190 = vcvt.s32.f32 %v174
  %v191 = vcvt.s32.f32 %v175
  %v192 = vcvt.s32.f32 %v176
  %v193 = vcvt.s32.f32 %v177
  %v194 = vcvt.s32.f32 %v178
  %v195 = vcvt.s32.f32 %v179
  %v196 = vcvt.s32.f32 %v180
  %v197 = vcvt.s32.f32 %v181
  %v198 = vcvt.s32.f32 %v182
  %v199 = vpack.c.bf16 %v184, %v183
  %v200 = vpack.c.bf16 %v186, %v185
  %v201 = vpack.c.bf16 %v188, %v187
  %v202 = vpack.c.bf16 %v190, %v189
  %v203 = vpack.c.bf16 %v192, %v191
  %v204 = vpack.c.bf16 %v194, %v193
  %v205 = vpack.c.bf16 %v196, %v195
  %v206 = vpack.c.bf16 %v198, %v197
  %v207 = vsub.s32 %v31, 256
  %v208 = vlaneseq
  %v209 = vshrl.u32 %v208, 7
  %v210 = vsub.s32 0, %v209
  %v211 = vrot.slane %v207, %v210
  %vm212 = vcmp.eq.s32.totalorder %v33, %v211
  %vm213 = vcmp.eq.s32.totalorder %v34, %v211
  %vm214 = vcmp.eq.s32.totalorder %v35, %v211
  %vm215 = vcmp.eq.s32.totalorder %v36, %v211
  %vm216 = vcmp.eq.s32.totalorder %v37, %v211
  %vm217 = vcmp.eq.s32.totalorder %v38, %v211
  %vm218 = vcmp.eq.s32.totalorder %v39, %v211
  %vm219 = vcmp.eq.s32.totalorder %v40, %v211
  %vm220 = vcmp.eq.s32.totalorder %v41, %v211
  %vm221 = vcmp.eq.s32.totalorder %v42, %v211
  %vm222 = vcmp.eq.s32.totalorder %v43, %v211
  %vm223 = vcmp.eq.s32.totalorder %v44, %v211
  %vm224 = vcmp.eq.s32.totalorder %v45, %v211
  %vm225 = vcmp.eq.s32.totalorder %v46, %v211
  %vm226 = vcmp.eq.s32.totalorder %v47, %v211
  %vm227 = vcmp.eq.s32.totalorder %v48, %v211
  %v228 = vsel %vm212, 1, 0
  %v229 = vsel %vm213, 1, 0
  %v230 = vsel %vm214, 1, 0
  %v231 = vsel %vm215, 1, 0
  %v232 = vsel %vm216, 1, 0
  %v233 = vsel %vm217, 1, 0
  %v234 = vsel %vm218, 1, 0
  %v235 = vsel %vm219, 1, 0
  %v236 = vsel %vm220, 1, 0
  %v237 = vsel %vm221, 1, 0
  %v238 = vsel %vm222, 1, 0
  %v239 = vsel %vm223, 1, 0
  %v240 = vsel %vm224, 1, 0
  %v241 = vsel %vm225, 1, 0
  %v242 = vsel %vm226, 1, 0
  %v243 = vsel %vm227, 1, 0
  %v244 = vcvt.s32.f32 %v228
  %v245 = vcvt.s32.f32 %v229
  %v246 = vcvt.s32.f32 %v230
  %v247 = vcvt.s32.f32 %v231
  %v248 = vcvt.s32.f32 %v232
  %v249 = vcvt.s32.f32 %v233
  %v250 = vcvt.s32.f32 %v234
  %v251 = vcvt.s32.f32 %v235
  %v252 = vcvt.s32.f32 %v236
  %v253 = vcvt.s32.f32 %v237
  %v254 = vcvt.s32.f32 %v238
  %v255 = vcvt.s32.f32 %v239
  %v256 = vcvt.s32.f32 %v240
  %v257 = vcvt.s32.f32 %v241
  %v258 = vcvt.s32.f32 %v242
  %v259 = vcvt.s32.f32 %v243
  %v260 = vpack.c.bf16 %v245, %v244
  %v261 = vpack.c.bf16 %v247, %v246
  %v262 = vpack.c.bf16 %v249, %v248
  %v263 = vpack.c.bf16 %v251, %v250
  %v264 = vpack.c.bf16 %v253, %v252
  %v265 = vpack.c.bf16 %v255, %v254
  %v266 = vpack.c.bf16 %v257, %v256
  %v267 = vpack.c.bf16 %v259, %v258
  %v268 = vld [vmem:[%s2] sm:$0xf]
  %v269 = vld [vmem:[%s2 + $0xc] sm:$0xf]
  %v270 = vld [vmem:[%s2 + $0x18] sm:$0xf]
  %v271 = vld [vmem:[%s2 + $0x24] sm:$0xf]
  %v272 = vld [vmem:[%s2 + $0x4] sm:$0xf]
  %v273 = vld [vmem:[%s2 + $0x10] sm:$0xf]
  %v274 = vld [vmem:[%s2 + $0x1c] sm:$0xf]
  %v275 = vld [vmem:[%s2 + $0x28] sm:$0xf]
  %v280 = vunpack.c.l.b16 %v272
  %v281 = vunpack.c.l.b16 %v273
  %v282 = vunpack.c.l.b16 %v274
  %v283 = vunpack.c.l.b16 %v275
  %v284 = vpack.c.b16 %v281, %v280
  %v285 = vpack.c.b16 %v283, %v282
  %288 = vmatprep.subr.bf16.mxu0 0
  %289 = vmatpush1.bf16.msra.mxu0 %v206
  %290 = vmatprep.subr.bf16.mxu0 0
  %291 = vmatpush1.bf16.msra.mxu0 %v205
  %292 = vmatprep.subr.bf16.mxu0 0
  %293 = vmatpush1.bf16.msra.mxu0 %v204
  %294 = vmatprep.subr.bf16.mxu0 0
  %295 = vmatpush1.bf16.msra.mxu0 %v203
  %296 = vmatprep.subr.bf16.mxu0 0
  %297 = vmatpush1.bf16.msra.mxu0 %v202
  %298 = vmatprep.subr.bf16.mxu0 0
  %299 = vmatpush1.bf16.msra.mxu0 %v201
  %300 = vmatprep.subr.bf16.mxu0 0
  %301 = vmatpush1.bf16.msra.mxu0 %v200
  %302 = vmatprep.subr.bf16.mxu0 0
  %303 = vmatpush1.bf16.msra.mxu0 %v199
  %304 = vmatprep.subr.bf16.mxu0 0
  %305 = vmatpush2.bf16.msra.mxu0 0
  %306 = vmatprep.subr.bf16.mxu0 0
  %307 = vmatpush2.bf16.msra.mxu0 0
  %308 = vmatprep.subr.bf16.mxu0 0
  %309 = vmatpush2.bf16.msra.mxu0 0
  %310 = vmatprep.subr.bf16.mxu0 0
  %311 = vmatpush2.bf16.msra.mxu0 0
  %312 = vmatprep.subr.bf16.mxu0 0
  %313 = vmatpush2.bf16.msra.mxu0 0
  %314 = vmatprep.subr.bf16.mxu0 0
  %315 = vmatpush2.bf16.msra.mxu0 0
  %316 = vmatprep.subr.bf16.mxu0 0
  %317 = vmatpush2.bf16.msra.mxu0 0
  %318 = vmatprep.subr.bf16.mxu0 0
  %319 = vmatpush2.bf16.msra.mxu0 0
  %320 = vmatprep.mubr.bf16.mxu0 0
  %321 = vmatmul.mubr.bf16.gmra.mxu0 %v284
  %v322 = vpop.f32.mrf.mxu0
  %v323 = vadd.f32 0.0, %v322
  %v324 = vpop.f32.mrf.mxu0
  %v325 = vpop.f32.mrf.mxu0
  %v326 = vadd.f32 0.0, %v325
  %v327 = vpop.f32.mrf.mxu0
  %328 = vmatprep.mubr.bf16.mxu0 0
  %329 = vmatmul.mubr.bf16.gmra.mxu0 %v285
  %v330 = vpop.f32.mrf.mxu0
  %v331 = vadd.f32 0.0, %v330
  %v332 = vpop.f32.mrf.mxu0
  %v333 = vpop.f32.mrf.mxu0
  %v334 = vadd.f32 0.0, %v333
  %v335 = vpop.f32.mrf.mxu0
  %336 = vdwg.mxu0
  %v341 = vunpack.c.l.b16 %v268
  %v342 = vunpack.c.l.b16 %v269
  %v343 = vunpack.c.l.b16 %v270
  %v344 = vunpack.c.l.b16 %v271
  %v345 = vpack.c.b16 %v342, %v341
  %v346 = vpack.c.b16 %v344, %v343
  %349 = vmatprep.subr.bf16.mxu0 0
  %350 = vmatpush1.bf16.msra.mxu0 %v108
  %351 = vmatprep.subr.bf16.mxu0 0
  %352 = vmatpush1.bf16.msra.mxu0 %v107
  %353 = vmatprep.subr.bf16.mxu0 0
  %354 = vmatpush1.bf16.msra.mxu0 %v106
  %355 = vmatprep.subr.bf16.mxu0 0
  %356 = vmatpush1.bf16.msra.mxu0 %v105
  %357 = vmatprep.subr.bf16.mxu0 0
  %358 = vmatpush1.bf16.msra.mxu0 %v104
  %359 = vmatprep.subr.bf16.mxu0 0
  %360 = vmatpush1.bf16.msra.mxu0 %v103
  %361 = vmatprep.subr.bf16.mxu0 0
  %362 = vmatpush1.bf16.msra.mxu0 %v102
  %363 = vmatprep.subr.bf16.mxu0 0
  %364 = vmatpush1.bf16.msra.mxu0 %v101
  %365 = vmatprep.subr.bf16.mxu0 0
  %366 = vmatpush2.bf16.msra.mxu0 0
  %367 = vmatprep.subr.bf16.mxu0 0
  %368 = vmatpush2.bf16.msra.mxu0 0
  %369 = vmatprep.subr.bf16.mxu0 0
  %370 = vmatpush2.bf16.msra.mxu0 0
  %371 = vmatprep.subr.bf16.mxu0 0
  %372 = vmatpush2.bf16.msra.mxu0 0
  %373 = vmatprep.subr.bf16.mxu0 0
  %374 = vmatpush2.bf16.msra.mxu0 0
  %375 = vmatprep.subr.bf16.mxu0 0
  %376 = vmatpush2.bf16.msra.mxu0 0
  %377 = vmatprep.subr.bf16.mxu0 0
  %378 = vmatpush2.bf16.msra.mxu0 0
  %379 = vmatprep.subr.bf16.mxu0 0
  %380 = vmatpush2.bf16.msra.mxu0 0
  %381 = vmatprep.mubr.bf16.mxu0 0
  %382 = vmatmul.mubr.bf16.gmra.mxu0 %v345
  %v383 = vpop.f32.mrf.mxu0
  %v384 = vadd.f32 %v323, %v383
  %v385 = vpop.f32.mrf.mxu0
  %v386 = vpop.f32.mrf.mxu0
  %v387 = vadd.f32 %v326, %v386
  %v388 = vpop.f32.mrf.mxu0
  %389 = vmatprep.mubr.bf16.mxu0 0
  %390 = vmatmul.mubr.bf16.gmra.mxu0 %v346
  %v391 = vpop.f32.mrf.mxu0
  %v392 = vadd.f32 %v331, %v391
  %v393 = vpop.f32.mrf.mxu0
  %v394 = vpop.f32.mrf.mxu0
  %v395 = vadd.f32 %v334, %v394
  %v396 = vpop.f32.mrf.mxu0
  %397 = vdwg.mxu0
  %v398 = vld [vmem:[%s2 + $0x8] sm:$0xf]
  %v399 = vld [vmem:[%s2 + $0x14] sm:$0xf]
  %v400 = vld [vmem:[%s2 + $0x20] sm:$0xf]
  %v401 = vld [vmem:[%s2 + $0x2c] sm:$0xf]
  %v406 = vunpack.c.l.b16 %v398
  %v407 = vunpack.c.l.b16 %v399
  %v408 = vunpack.c.l.b16 %v400
  %v409 = vunpack.c.l.b16 %v401
  %v410 = vpack.c.b16 %v407, %v406
  %v411 = vpack.c.b16 %v409, %v408
  %414 = vmatprep.subr.bf16.mxu0 0
  %415 = vmatpush1.bf16.msra.mxu0 %v267
  %416 = vmatprep.subr.bf16.mxu0 0
  %417 = vmatpush1.bf16.msra.mxu0 %v266
  %418 = vmatprep.subr.bf16.mxu0 0
  %419 = vmatpush1.bf16.msra.mxu0 %v265
  %420 = vmatprep.subr.bf16.mxu0 0
  %421 = vmatpush1.bf16.msra.mxu0 %v264
  %422 = vmatprep.subr.bf16.mxu0 0
  %423 = vmatpush1.bf16.msra.mxu0 %v263
  %424 = vmatprep.subr.bf16.mxu0 0
  %425 = vmatpush1.bf16.msra.mxu0 %v262
  %426 = vmatprep.subr.bf16.mxu0 0
  %427 = vmatpush1.bf16.msra.mxu0 %v261
  %428 = vmatprep.subr.bf16.mxu0 0
  %429 = vmatpush1.bf16.msra.mxu0 %v260
  %430 = vmatprep.subr.bf16.mxu0 0
  %431 = vmatpush2.bf16.msra.mxu0 0
  %432 = vmatprep.subr.bf16.mxu0 0
  %433 = vmatpush2.bf16.msra.mxu0 0
  %434 = vmatprep.subr.bf16.mxu0 0
  %435 = vmatpush2.bf16.msra.mxu0 0
  %436 = vmatprep.subr.bf16.mxu0 0
  %437 = vmatpush2.bf16.msra.mxu0 0
  %438 = vmatprep.subr.bf16.mxu0 0
  %439 = vmatpush2.bf16.msra.mxu0 0
  %440 = vmatprep.subr.bf16.mxu0 0
  %441 = vmatpush2.bf16.msra.mxu0 0
  %442 = vmatprep.subr.bf16.mxu0 0
  %443 = vmatpush2.bf16.msra.mxu0 0
  %444 = vmatprep.subr.bf16.mxu0 0
  %445 = vmatpush2.bf16.msra.mxu0 0
  %446 = vmatprep.mubr.bf16.mxu0 0
  %447 = vmatmul.mubr.bf16.gmra.mxu0 %v410
  %v448 = vpop.f32.mrf.mxu0
  %v449 = vadd.f32 0.0, %v448
  %v450 = vpop.f32.mrf.mxu0
  %v451 = vpop.f32.mrf.mxu0
  %v452 = vadd.f32 0.0, %v451
  %v453 = vpop.f32.mrf.mxu0
  %454 = vmatprep.mubr.bf16.mxu0 0
  %455 = vmatmul.mubr.bf16.gmra.mxu0 %v411
  %v456 = vpop.f32.mrf.mxu0
  %v457 = vadd.f32 0.0, %v456
  %v458 = vpop.f32.mrf.mxu0
  %v459 = vpop.f32.mrf.mxu0
  %v460 = vadd.f32 0.0, %v459
  %v461 = vpop.f32.mrf.mxu0
  %462 = vdwg.mxu0
  %v463 = vadd.f32 %v384, %v449
  %v464 = vadd.f32 %v387, %v452
  %v465 = vadd.f32 %v392, %v457
  %v466 = vadd.f32 %v395, %v460
  %v467 = vld [vmem:[%s3] sm:$0xff]
  %v468 = vld [vmem:[%s3 + $0x8] sm:$0xff]
  %v469 = vld [vmem:[%s3 + $0x10] sm:$0xff]
  %v470 = vld [vmem:[%s3 + $0x18] sm:$0xff]
  %v471 = vld [vmem:[%s1] sm:$0xff]
  %v472 = vld [vmem:[%s1 + $0x8] sm:$0xff]
  %vm473 = vcmask 130048
  %v475 = vsel %vm473, %v467, 0
  %v478 = vsel %vm473, %v468, 0
  %v481 = vsel %vm473, %v469, 0
  %v484 = vsel %vm473, %v470, 0
  %486 = vmatprep.subr.mxu0 0.0
  %487 = vmatpush1.msra.mxu0 0.0
  %488 = vmatprep.subr.mxu0 0.0
  %489 = vmatpush1.msra.mxu0 0.0
  %490 = vmatprep.subr.mxu0 0.0
  %491 = vmatpush1.msra.mxu0 0.0
  %492 = vmatprep.subr.mxu0 0.0
  %493 = vmatpush1.msra.mxu0 0.0
  %494 = vmatprep.subr.mxu0 0.0
  %495 = vmatpush1.msra.mxu0 0.0
  %496 = vmatprep.subr.mxu0 0.0
  %497 = vmatpush1.msra.mxu0 0.0
  %498 = vmatprep.subr.mxu0 0.0
  %499 = vmatpush1.msra.mxu0 0.0
  %500 = vmatprep.subr.mxu0 0.0
  %501 = vmatpush1.msra.mxu0 0.0
  %502 = vmatprep.subr.mxu0 0.0
  %503 = vmatpush1.msra.mxu0 0.0
  %504 = vmatprep.subr.mxu0 0.0
  %505 = vmatpush1.msra.mxu0 0.0
  %506 = vmatprep.subr.mxu0 0.0
  %507 = vmatpush1.msra.mxu0 0.0
  %508 = vmatprep.subr.mxu0 0.0
  %509 = vmatpush1.msra.mxu0 0.0
  %510 = vmatprep.subr.mxu0 0.0
  %511 = vmatpush1.msra.mxu0 0.0
  %512 = vmatprep.subr.mxu0 0.0
  %513 = vmatpush1.msra.mxu0 0.0
  %514 = vmatprep.subr.mxu0 0.0
  %515 = vmatpush1.msra.mxu0 %v472
  %516 = vmatprep.subr.mxu0 0.0
  %517 = vmatpush1.msra.mxu0 %v471
  %518 = vmatprep.subr.mxu0 0.0
  %519 = vmatpush2.msra.mxu0 0.0
  %520 = vmatprep.subr.mxu0 0.0
  %521 = vmatpush2.msra.mxu0 0.0
  %522 = vmatprep.subr.mxu0 0.0
  %523 = vmatpush2.msra.mxu0 0.0
  %524 = vmatprep.subr.mxu0 0.0
  %525 = vmatpush2.msra.mxu0 0.0
  %526 = vmatprep.subr.mxu0 0.0
  %527 = vmatpush2.msra.mxu0 0.0
  %528 = vmatprep.subr.mxu0 0.0
  %529 = vmatpush2.msra.mxu0 0.0
  %530 = vmatprep.subr.mxu0 0.0
  %531 = vmatpush2.msra.mxu0 0.0
  %532 = vmatprep.subr.mxu0 0.0
  %533 = vmatpush2.msra.mxu0 0.0
  %534 = vmatprep.subr.mxu0 0.0
  %535 = vmatpush2.msra.mxu0 0.0
  %536 = vmatprep.subr.mxu0 0.0
  %537 = vmatpush2.msra.mxu0 0.0
  %538 = vmatprep.subr.mxu0 0.0
  %539 = vmatpush2.msra.mxu0 0.0
  %540 = vmatprep.subr.mxu0 0.0
  %541 = vmatpush2.msra.mxu0 0.0
  %542 = vmatprep.subr.mxu0 0.0
  %543 = vmatpush2.msra.mxu0 0.0
  %544 = vmatprep.subr.mxu0 0.0
  %545 = vmatpush2.msra.mxu0 0.0
  %546 = vmatprep.subr.mxu0 0.0
  %547 = vmatpush2.msra.mxu0 0.0
  %548 = vmatprep.subr.mxu0 0.0
  %549 = vmatpush2.msra.mxu0 0.0
  %550 = vmatprep.mubr.f32.mxu0 0.0
  %551 = vmatmul.mubr.f32.gmra.mxu0 %v475
  %v552 = vpop.f32.mrf.mxu0
  %v553 = vadd.f32 0.0, %v552
  %v554 = vpop.f32.mrf.mxu0
  %555 = vmatprep.mubr.f32.mxu0 0.0
  %556 = vmatmul.mubr.f32.gmra.mxu0 %v478
  %v557 = vpop.f32.mrf.mxu0
  %v558 = vadd.f32 0.0, %v557
  %v559 = vpop.f32.mrf.mxu0
  %560 = vmatprep.mubr.f32.mxu0 0.0
  %561 = vmatmul.mubr.f32.gmra.mxu0 %v481
  %v562 = vpop.f32.mrf.mxu0
  %v563 = vadd.f32 0.0, %v562
  %v564 = vpop.f32.mrf.mxu0
  %565 = vmatprep.mubr.f32.mxu0 0.0
  %566 = vmatmul.mubr.f32.gmra.mxu0 %v484
  %v567 = vpop.f32.mrf.mxu0
  %v568 = vadd.f32 0.0, %v567
  %v569 = vpop.f32.mrf.mxu0
  %570 = vdwg.mxu0
  %v571 = vadd.f32 %v463, %v553
  %v572 = vadd.f32 %v464, %v558
  %v573 = vadd.f32 %v465, %v563
  %v574 = vadd.f32 %v466, %v568
  %v575 = vmax.f32 %v571, 0.0
  %v576 = vmax.f32 %v572, 0.0
  %v577 = vmax.f32 %v573, 0.0
  %v578 = vmax.f32 %v574, 0.0
  %v579 = vld [vmem:[%s4] sm:$0xff]
  %v580 = vld [vmem:[%s4 + $0x8] sm:$0xff]
  %v581 = vld [vmem:[%s4 + $0x10] sm:$0xff]
  %v582 = vld [vmem:[%s4 + $0x18] sm:$0xff]
  %v583 = vld [vmem:[%s5] sm:$0xff]
  %v584 = vld [vmem:[%s5 + $0x8] sm:$0xff]
  %v585 = vld [vmem:[%s5 + $0x10] sm:$0xff]
  %v586 = vld [vmem:[%s5 + $0x18] sm:$0xff]
  %588 = vset.pattern.permute.xlu0 0
  %589 = vperm.xlu0 %588, %v583
  %v590 = vpop.permute.xlu0 %589
  %593 = vset.pattern.permute.xlu0 0
  %594 = vperm.xlu0 %593, %v584
  %v595 = vpop.permute.xlu0 %594
  %598 = vset.pattern.permute.xlu0 0
  %599 = vperm.xlu0 %598, %v585
  %v600 = vpop.permute.xlu0 %599
  %603 = vset.pattern.permute.xlu0 0
  %604 = vperm.xlu0 %603, %v586
  %v605 = vpop.permute.xlu0 %604
  %vm607 = vcmask 261120
  %v609 = vsel %vm607, %v579, 0
  %v612 = vsel %vm607, %v580, 0
  %v615 = vsel %vm607, %v581, 0
  %v618 = vsel %vm607, %v582, 0
  %620 = vmatprep.subr.mxu0 0.0
  %621 = vmatpush1.msra.mxu0 0.0
  %622 = vmatprep.subr.mxu0 0.0
  %623 = vmatpush1.msra.mxu0 0.0
  %624 = vmatprep.subr.mxu0 0.0
  %625 = vmatpush1.msra.mxu0 0.0
  %626 = vmatprep.subr.mxu0 0.0
  %627 = vmatpush1.msra.mxu0 0.0
  %628 = vmatprep.subr.mxu0 0.0
  %629 = vmatpush1.msra.mxu0 0.0
  %630 = vmatprep.subr.mxu0 0.0
  %631 = vmatpush1.msra.mxu0 0.0
  %632 = vmatprep.subr.mxu0 0.0
  %633 = vmatpush1.msra.mxu0 0.0
  %634 = vmatprep.subr.mxu0 0.0
  %635 = vmatpush1.msra.mxu0 0.0
  %636 = vmatprep.subr.mxu0 0.0
  %637 = vmatpush1.msra.mxu0 0.0
  %638 = vmatprep.subr.mxu0 0.0
  %639 = vmatpush1.msra.mxu0 0.0
  %640 = vmatprep.subr.mxu0 0.0
  %641 = vmatpush1.msra.mxu0 0.0
  %642 = vmatprep.subr.mxu0 0.0
  %643 = vmatpush1.msra.mxu0 0.0
  %644 = vmatprep.subr.mxu0 0.0
  %645 = vmatpush1.msra.mxu0 %v578
  %646 = vmatprep.subr.mxu0 0.0
  %647 = vmatpush1.msra.mxu0 %v577
  %648 = vmatprep.subr.mxu0 0.0
  %649 = vmatpush1.msra.mxu0 %v576
  %650 = vmatprep.subr.mxu0 0.0
  %651 = vmatpush1.msra.mxu0 %v575
  %652 = vmatprep.subr.mxu0 0.0
  %653 = vmatpush2.msra.mxu0 0.0
  %654 = vmatprep.subr.mxu0 0.0
  %655 = vmatpush2.msra.mxu0 0.0
  %656 = vmatprep.subr.mxu0 0.0
  %657 = vmatpush2.msra.mxu0 0.0
  %658 = vmatprep.subr.mxu0 0.0
  %659 = vmatpush2.msra.mxu0 0.0
  %660 = vmatprep.subr.mxu0 0.0
  %661 = vmatpush2.msra.mxu0 0.0
  %662 = vmatprep.subr.mxu0 0.0
  %663 = vmatpush2.msra.mxu0 0.0
  %664 = vmatprep.subr.mxu0 0.0
  %665 = vmatpush2.msra.mxu0 0.0
  %666 = vmatprep.subr.mxu0 0.0
  %667 = vmatpush2.msra.mxu0 0.0
  %668 = vmatprep.subr.mxu0 0.0
  %669 = vmatpush2.msra.mxu0 0.0
  %670 = vmatprep.subr.mxu0 0.0
  %671 = vmatpush2.msra.mxu0 0.0
  %672 = vmatprep.subr.mxu0 0.0
  %673 = vmatpush2.msra.mxu0 0.0
  %674 = vmatprep.subr.mxu0 0.0
  %675 = vmatpush2.msra.mxu0 0.0
  %676 = vmatprep.subr.mxu0 0.0
  %677 = vmatpush2.msra.mxu0 0.0
  %678 = vmatprep.subr.mxu0 0.0
  %679 = vmatpush2.msra.mxu0 0.0
  %680 = vmatprep.subr.mxu0 0.0
  %681 = vmatpush2.msra.mxu0 0.0
  %682 = vmatprep.subr.mxu0 0.0
  %683 = vmatpush2.msra.mxu0 0.0
  %684 = vmatprep.mubr.f32.mxu0 0.0
  %685 = vmatmul.mubr.f32.gmra.mxu0 %v609
  %v686 = vpop.f32.mrf.mxu0
  %v687 = vadd.f32 %v590, %v686
  %v688 = vpop.f32.mrf.mxu0
  %689 = vmatprep.mubr.f32.mxu0 0.0
  %690 = vmatmul.mubr.f32.gmra.mxu0 %v612
  %v691 = vpop.f32.mrf.mxu0
  %v692 = vadd.f32 %v595, %v691
  %v693 = vpop.f32.mrf.mxu0
  %694 = vmatprep.mubr.f32.mxu0 0.0
  %695 = vmatmul.mubr.f32.gmra.mxu0 %v615
  %v696 = vpop.f32.mrf.mxu0
  %v697 = vadd.f32 %v600, %v696
  %v698 = vpop.f32.mrf.mxu0
  %699 = vmatprep.mubr.f32.mxu0 0.0
  %700 = vmatmul.mubr.f32.gmra.mxu0 %v618
  %v701 = vpop.f32.mrf.mxu0
  %v702 = vadd.f32 %v605, %v701
  %v703 = vpop.f32.mrf.mxu0
  %704 = vdwg.mxu0
  %v705 = vmax.f32 %v687, 0.0
  %v706 = vmax.f32 %v692, 0.0
  %v707 = vmax.f32 %v697, 0.0
  %v708 = vmax.f32 %v702, 0.0
  %v709 = vld [vmem:[%s6] sm:$0x7]
  %v710 = vld [vmem:[%s7] sm:$0x7]
  %712 = vset.pattern.permute.xlu0 0
  %713 = vperm.xlu0 %712, %v710
  %v714 = vpop.permute.xlu0 %713
  %v717 = vsel %vm607, %v709, 0
  %719 = vmatprep.subr.mxu0 0.0
  %720 = vmatpush1.msra.mxu0 0.0
  %721 = vmatprep.subr.mxu0 0.0
  %722 = vmatpush1.msra.mxu0 0.0
  %723 = vmatprep.subr.mxu0 0.0
  %724 = vmatpush1.msra.mxu0 0.0
  %725 = vmatprep.subr.mxu0 0.0
  %726 = vmatpush1.msra.mxu0 0.0
  %727 = vmatprep.subr.mxu0 0.0
  %728 = vmatpush1.msra.mxu0 0.0
  %729 = vmatprep.subr.mxu0 0.0
  %730 = vmatpush1.msra.mxu0 0.0
  %731 = vmatprep.subr.mxu0 0.0
  %732 = vmatpush1.msra.mxu0 0.0
  %733 = vmatprep.subr.mxu0 0.0
  %734 = vmatpush1.msra.mxu0 0.0
  %735 = vmatprep.subr.mxu0 0.0
  %736 = vmatpush1.msra.mxu0 0.0
  %737 = vmatprep.subr.mxu0 0.0
  %738 = vmatpush1.msra.mxu0 0.0
  %739 = vmatprep.subr.mxu0 0.0
  %740 = vmatpush1.msra.mxu0 0.0
  %741 = vmatprep.subr.mxu0 0.0
  %742 = vmatpush1.msra.mxu0 0.0
  %743 = vmatprep.subr.mxu0 0.0
  %744 = vmatpush1.msra.mxu0 %v708
  %745 = vmatprep.subr.mxu0 0.0
  %746 = vmatpush1.msra.mxu0 %v707
  %747 = vmatprep.subr.mxu0 0.0
  %748 = vmatpush1.msra.mxu0 %v706
  %749 = vmatprep.subr.mxu0 0.0
  %750 = vmatpush1.msra.mxu0 %v705
  %751 = vmatprep.subr.mxu0 0.0
  %752 = vmatpush2.msra.mxu0 0.0
  %753 = vmatprep.subr.mxu0 0.0
  %754 = vmatpush2.msra.mxu0 0.0
  %755 = vmatprep.subr.mxu0 0.0
  %756 = vmatpush2.msra.mxu0 0.0
  %757 = vmatprep.subr.mxu0 0.0
  %758 = vmatpush2.msra.mxu0 0.0
  %759 = vmatprep.subr.mxu0 0.0
  %760 = vmatpush2.msra.mxu0 0.0
  %761 = vmatprep.subr.mxu0 0.0
  %762 = vmatpush2.msra.mxu0 0.0
  %763 = vmatprep.subr.mxu0 0.0
  %764 = vmatpush2.msra.mxu0 0.0
  %765 = vmatprep.subr.mxu0 0.0
  %766 = vmatpush2.msra.mxu0 0.0
  %767 = vmatprep.subr.mxu0 0.0
  %768 = vmatpush2.msra.mxu0 0.0
  %769 = vmatprep.subr.mxu0 0.0
  %770 = vmatpush2.msra.mxu0 0.0
  %771 = vmatprep.subr.mxu0 0.0
  %772 = vmatpush2.msra.mxu0 0.0
  %773 = vmatprep.subr.mxu0 0.0
  %774 = vmatpush2.msra.mxu0 0.0
  %775 = vmatprep.subr.mxu0 0.0
  %776 = vmatpush2.msra.mxu0 0.0
  %777 = vmatprep.subr.mxu0 0.0
  %778 = vmatpush2.msra.mxu0 0.0
  %779 = vmatprep.subr.mxu0 0.0
  %780 = vmatpush2.msra.mxu0 0.0
  %781 = vmatprep.subr.mxu0 0.0
  %782 = vmatpush2.msra.mxu0 0.0
  %783 = vmatprep.mubr.f32.mxu0 0.0
  %784 = vmatmul.mubr.f32.gmra.mxu0 %v717
  %v785 = vpop.f32.mrf.mxu0
  %v786 = vadd.f32 %v714, %v785
  %v787 = vpop.f32.mrf.mxu0
  %788 = vdwg.mxu0
  %v790 = vrot.slane %v786, 1
  %v792 = vmax.f32 %v786, %v790
  %v793 = vrot.slane %v786, 2
  %v795 = vmax.f32 %v792, %v793
  %v796 = vlaneseq
  %v797 = vshrl.u32 %v796, 7
  %v798 = vsub.s32 0, %v797
  %v799 = vrot.slane %v795, %v798
  %v800 = vsub.f32 %v786, %v799
  %v801 = vmul.f32 %v800, 1.442695
  %v802 = vpow.pop %v801
  %v804 = vrot.slane %v802, 1
  %v806 = vadd.f32 %v802, %v804
  %v807 = vrot.slane %v802, 2
  %v809 = vadd.f32 %v806, %v807
  %v810 = vrcp.pop %v809
  %v811 = vlaneseq
  %v812 = vshrl.u32 %v811, 7
  %v813 = vsub.s32 0, %v812
  %v814 = vrot.slane %v810, %v813
  %v815 = vmul.f32 %v802, %v814
  %816 = vst [vmem:[%s8] sm:$0x7] %v815
  // Predicated region
  $region34: #{tabular_nn_forward.1} parent=0 // pred_check
    _
  $region35: #{tabular_nn_forward.1} parent=0 // pred_check_branch
    %818 = sbr.rel (0) target = $region37
  $region36: #{tabular_nn_forward.1} parent=0 // pred_region
    _
  $region37: #{tabular_nn_forward.1} parent=0 // pred_fallthru
    _
  // Predicated region
  $region38: #{tabular_nn_forward.1} parent=0 // pred_check
    _
  $region39: #{tabular_nn_forward.1} parent=0 // pred_check_branch
    %820 = sbr.rel (0) target = $region41
  $region40: #{tabular_nn_forward.1} parent=0 // pred_region
    _
  $region41: #{tabular_nn_forward.1} parent=0 // pred_fallthru
    _

</llo_original>
